<compile_context>
chip_gen: v7x
topology: tpu7x:2x2x1
jax: 0.10.0
libtpu: 0.0.40
codegen_flags: <defaults>
</compile_context>

<pallas_src>
import functools

import jax
import jax.numpy as jnp
from jax import lax
from jax.experimental import pallas as pl
from jax.experimental.pallas import tpu as pltpu


def _round_up(x, m):
    return ((x + m - 1) // m) * m


def _xavier_uniform(key, fan_in, fan_out, dtype=jnp.float32):
    """Matches torch.nn.init.xavier_uniform_ with gain=1 (deterministic here)."""
    limit = float(jnp.sqrt(6.0 / (fan_in + fan_out)))
    return jax.random.uniform(key, (fan_in, fan_out), dtype, -limit, limit)


def qnetwork_kernel(s_ref, a_ref, w1s_ref, w1a_ref, b1_ref,
                    w2_ref, b2_ref, w3t_ref, b3_ref, o_ref):
    """Fused MLP on one batch tile: relu(s@W1s + a@W1a + b1) -> relu(@W2+b2) -> W3."""
    # Layer 1: concat(state, action) @ W1 expressed as two dots (no concat needed).
    s = s_ref[...].astype(jnp.bfloat16)
    a = a_ref[...].astype(jnp.bfloat16)
    h1 = jnp.dot(s, w1s_ref[...], preferred_element_type=jnp.float32)
    h1 = h1 + jnp.dot(a, w1a_ref[...], preferred_element_type=jnp.float32)
    h1 = jnp.maximum(h1 + b1_ref[...], 0.0)            # f32 epilogue (VPU)

    # Layer 2.
    h2 = jnp.dot(h1.astype(jnp.bfloat16), w2_ref[...],
                 preferred_element_type=jnp.float32)
    h2 = jnp.maximum(h2 + b2_ref[...], 0.0)

    # Layer 3: [1, H] contracted with [tile_b, H] on H -> [1, tile_b].
    # This yields the result already lane-dense for the store (no [tile_b, 1]
    # masked partial stores).
    y = lax.dot_general(w3t_ref[...], h2.astype(jnp.bfloat16),
                        dimension_numbers=(((1,), (1,)), ((), ())),
                        preferred_element_type=jnp.float32)
    o_ref[...] = (y + b3_ref[...]).astype(o_ref.dtype)


@functools.partial(jax.jit, static_argnames=("block_b",))
def qnetwork_forward(state, action, params, *, block_b=1024):
    """Pallas-backed forward pass.

    state:  [B, num_inputs]  float32
    action: [B, num_actions] float32
    returns [B, 1] float32
    """
    w1s, w1a, b1, w2, b2, w3t, b3 = params
    B, ni = state.shape
    na = action.shape[1]

    # Pad batch so every tile satisfies the (8, 128) layout constraints.
    b8 = max(_round_up(B, 8), 8)
    tile_b = block_b if b8 > block_b else b8        # block_b is a multiple of 8 & 128
    b_pad = _round_up(b8, tile_b)
    if b_pad != B:
        state = jnp.pad(state, ((0, b_pad - B), (0, 0)))
        action = jnp.pad(action, ((0, b_pad - B), (0, 0)))

    grid = (b_pad // tile_b,)

    def resident(arr):
        # Weights/biases: same block every grid step -> stay VMEM-resident.
        return pl.BlockSpec(arr.shape, lambda i: (0, 0))

    out = pl.pallas_call(
        qnetwork_kernel,
        out_shape=jax.ShapeDtypeStruct((1, b_pad), jnp.float32),
        grid_spec=pltpu.PrefetchScalarGridSpec(
            num_scalar_prefetch=0,
            grid=grid,
            in_specs=[
                pl.BlockSpec((tile_b, ni), lambda i: (i, 0)),   # state tile
                pl.BlockSpec((tile_b, na), lambda i: (i, 0)),   # action tile
                resident(w1s), resident(w1a), resident(b1),
                resident(w2), resident(b2),
                resident(w3t), resident(b3),
            ],
            out_specs=pl.BlockSpec((1, tile_b), lambda i: (0, i)),  # lane-dense
        ),
        compiler_params=pltpu.CompilerParams(
            dimension_semantics=("parallel",),       # shard batch tiles across TCs (v7x)
            vmem_limit_bytes=32 * 1024 * 1024,       # explicit budget, safe on v5e..v7x
        ),
    )(state, action, w1s, w1a, b1, w2, b2, w3t, b3)

    return out[0, :B][:, None]                       # [B, 1]


def init_qnetwork_params(seed, num_inputs, num_actions, hidden_dim):
    """Mirrors QNetwork.__init__: xavier_uniform weights (gain=1), zero biases.

    W1 is split into (state, action) halves; W3 is stored transposed [1, H];
    matmul weights are kept in bf16, biases in f32.
    """
    k1, k2, k3 = jax.random.split(jax.random.PRNGKey(seed), 3)
    in_dim = num_inputs + num_actions
    w1 = _xavier_uniform(k1, in_dim, hidden_dim)
    w1s = w1[:num_inputs].astype(jnp.bfloat16)
    w1a = w1[num_inputs:].astype(jnp.bfloat16)
    b1 = jnp.zeros((1, hidden_dim), jnp.float32)
    w2 = _xavier_uniform(k2, hidden_dim, hidden_dim).astype(jnp.bfloat16)
    b2 = jnp.zeros((1, hidden_dim), jnp.float32)
    w3t = _xavier_uniform(k3, hidden_dim, 1).T.astype(jnp.bfloat16)   # [1, hidden]
    b3 = jnp.zeros((1, 1), jnp.float32)
    return (w1s, w1a, b1, w2, b2, w3t, b3)


def _reference_forward(state, action, params):
    """Pure-JAX reference with the same bf16-matmul / f32-accumulate numerics."""
    w1s, w1a, b1, w2, b2, w3t, b3 = params
    bf = jnp.bfloat16
    h1 = (jnp.dot(state.astype(bf), w1s, preferred_element_type=jnp.float32)
          + jnp.dot(action.astype(bf), w1a, preferred_element_type=jnp.float32))
    h1 = jnp.maximum(h1 + b1, 0.0)
    h2 = jnp.dot(h1.astype(bf), w2, preferred_element_type=jnp.float32)
    h2 = jnp.maximum(h2 + b2, 0.0)
    y = jnp.dot(h2.astype(bf), w3t.T, preferred_element_type=jnp.float32) + b3
    return y


if __name__ == "__main__":
    seed = 0
    batch, num_inputs, num_actions, hidden_dim = 2, 8, 4, 32
    params = init_qnetwork_params(seed, num_inputs, num_actions, hidden_dim)

    ks, ka = jax.random.split(jax.random.PRNGKey(0), 2)
    state = jax.random.normal(ks, (batch, num_inputs), jnp.float32)
    action = jax.random.normal(ka, (batch, num_actions), jnp.float32)

    out = jax.block_until_ready(qnetwork_forward(state, action, params))
    ref = _reference_forward(state, action, params)
    assert out.shape == (batch, 1), out.shape
    assert jnp.allclose(out, ref, atol=1e-3, rtol=1e-3), (out, ref)

    # Second check: exercises the multi-tile grid + batch padding path.
    b2_ = 300
    ks2, ka2 = jax.random.split(jax.random.PRNGKey(1), 2)
    state2 = jax.random.normal(ks2, (b2_, num_inputs), jnp.float32)
    action2 = jax.random.normal(ka2, (b2_, num_actions), jnp.float32)
    out2 = jax.block_until_ready(
        qnetwork_forward(state2, action2, params, block_b=128))
    ref2 = _reference_forward(state2, action2, params)
    assert out2.shape == (b2_, 1), out2.shape
    assert jnp.allclose(out2, ref2, atol=1e-3, rtol=1e-3)

    print("KERNEL_OK")
</pallas_src>

<mosaic_0001>
module attributes {stable_mosaic.version = 11 : i64} {
  func.func @qnetwork_kernel(%arg0: i32, %arg1: memref<8x8xf32, #tpu.memory_space<vmem>>, %arg2: memref<8x4xf32, #tpu.memory_space<vmem>>, %arg3: memref<8x32xbf16, #tpu.memory_space<vmem>>, %arg4: memref<4x32xbf16, #tpu.memory_space<vmem>>, %arg5: memref<1x32xf32, #tpu.memory_space<vmem>>, %arg6: memref<32x32xbf16, #tpu.memory_space<vmem>>, %arg7: memref<1x32xf32, #tpu.memory_space<vmem>>, %arg8: memref<1x32xbf16, #tpu.memory_space<vmem>>, %arg9: memref<1x1xf32, #tpu.memory_space<vmem>>, %arg10: memref<1x8xf32, #tpu.memory_space<vmem>>) attributes {dimension_semantics = [#tpu.dimension_semantics<parallel>], iteration_bounds = array<i64: 1>, scalar_prefetch = 0 : i64, scratch_operands = 0 : i64, tpu.core_type = #tpu.core_type<tc>, window_params = [{transform_indices = @transform_0, window_bounds = array<i64: 8, 8>}, {transform_indices = @transform_1, window_bounds = array<i64: 8, 4>}, {pipeline_mode = #tpu.pipeline_mode<synchronous>, transform_indices = @transform_2, window_bounds = array<i64: 8, 32>}, {pipeline_mode = #tpu.pipeline_mode<synchronous>, transform_indices = @transform_3, window_bounds = array<i64: 4, 32>}, {pipeline_mode = #tpu.pipeline_mode<synchronous>, transform_indices = @transform_4, window_bounds = array<i64: 1, 32>}, {pipeline_mode = #tpu.pipeline_mode<synchronous>, transform_indices = @transform_5, window_bounds = array<i64: 32, 32>}, {pipeline_mode = #tpu.pipeline_mode<synchronous>, transform_indices = @transform_6, window_bounds = array<i64: 1, 32>}, {pipeline_mode = #tpu.pipeline_mode<synchronous>, transform_indices = @transform_7, window_bounds = array<i64: 1, 32>}, {pipeline_mode = #tpu.pipeline_mode<synchronous>, transform_indices = @transform_8, window_bounds = array<i64: 1, 1>}, {transform_indices = @transform_9, window_bounds = array<i64: 1, 8>}]} {
    %c0 = arith.constant 0 : index
    %c0_0 = arith.constant 0 : index
    %0 = vector.load %arg1[%c0, %c0_0] : memref<8x8xf32, #tpu.memory_space<vmem>>, vector<8x8xf32>
    %1 = arith.truncf %0 : vector<8x8xf32> to vector<8x8xbf16>
    %c0_1 = arith.constant 0 : index
    %c0_2 = arith.constant 0 : index
    %2 = vector.load %arg2[%c0_1, %c0_2] : memref<8x4xf32, #tpu.memory_space<vmem>>, vector<8x4xf32>
    %3 = arith.truncf %2 : vector<8x4xf32> to vector<8x4xbf16>
    %c0_3 = arith.constant 0 : index
    %c0_4 = arith.constant 0 : index
    %4 = vector.load %arg3[%c0_3, %c0_4] : memref<8x32xbf16, #tpu.memory_space<vmem>>, vector<8x32xbf16>
    %cst = arith.constant dense<0.000000e+00> : vector<8x32xf32>
    %5 = tpu.matmul %1, %4, %cst {dimension_numbers = #tpu.dot_dimension_numbers<[1], [0], [0], [1], [0, 0, 1, 1], [], []>} : vector<8x8xbf16>, vector<8x32xbf16>, vector<8x32xf32> -> vector<8x32xf32>
    %c0_5 = arith.constant 0 : index
    %c0_6 = arith.constant 0 : index
    %6 = vector.load %arg4[%c0_5, %c0_6] : memref<4x32xbf16, #tpu.memory_space<vmem>>, vector<4x32xbf16>
    %cst_7 = arith.constant dense<0.000000e+00> : vector<8x32xf32>
    %7 = tpu.matmul %3, %6, %cst_7 {dimension_numbers = #tpu.dot_dimension_numbers<[1], [0], [0], [1], [0, 0, 1, 1], [], []>} : vector<8x4xbf16>, vector<4x32xbf16>, vector<8x32xf32> -> vector<8x32xf32>
    %8 = arith.addf %5, %7 : vector<8x32xf32>
    %c0_8 = arith.constant 0 : index
    %c0_9 = arith.constant 0 : index
    %9 = vector.load %arg5[%c0_8, %c0_9] : memref<1x32xf32, #tpu.memory_space<vmem>>, vector<1x32xf32>
    %10 = vector.broadcast %9 : vector<1x32xf32> to vector<8x32xf32>
    %11 = arith.addf %8, %10 : vector<8x32xf32>
    %cst_10 = arith.constant 0.000000e+00 : f32
    %12 = vector.broadcast %cst_10 : f32 to vector<8x32xf32>
    %13 = arith.maximumf %11, %12 : vector<8x32xf32>
    %14 = arith.truncf %13 : vector<8x32xf32> to vector<8x32xbf16>
    %c0_11 = arith.constant 0 : index
    %c0_12 = arith.constant 0 : index
    %15 = vector.load %arg6[%c0_11, %c0_12] : memref<32x32xbf16, #tpu.memory_space<vmem>>, vector<32x32xbf16>
    %cst_13 = arith.constant dense<0.000000e+00> : vector<8x32xf32>
    %16 = tpu.matmul %14, %15, %cst_13 {dimension_numbers = #tpu.dot_dimension_numbers<[1], [0], [0], [1], [0, 0, 1, 1], [], []>} : vector<8x32xbf16>, vector<32x32xbf16>, vector<8x32xf32> -> vector<8x32xf32>
    %c0_14 = arith.constant 0 : index
    %c0_15 = arith.constant 0 : index
    %17 = vector.load %arg7[%c0_14, %c0_15] : memref<1x32xf32, #tpu.memory_space<vmem>>, vector<1x32xf32>
    %18 = vector.broadcast %17 : vector<1x32xf32> to vector<8x32xf32>
    %19 = arith.addf %16, %18 : vector<8x32xf32>
    %cst_16 = arith.constant 0.000000e+00 : f32
    %20 = vector.broadcast %cst_16 : f32 to vector<8x32xf32>
    %21 = arith.maximumf %19, %20 : vector<8x32xf32>
    %c0_17 = arith.constant 0 : index
    %c0_18 = arith.constant 0 : index
    %22 = vector.load %arg8[%c0_17, %c0_18] : memref<1x32xbf16, #tpu.memory_space<vmem>>, vector<1x32xbf16>
    %23 = arith.truncf %21 : vector<8x32xf32> to vector<8x32xbf16>
    %cst_19 = arith.constant dense<0.000000e+00> : vector<1x8xf32>
    %24 = tpu.matmul %22, %23, %cst_19 {dimension_numbers = #tpu.dot_dimension_numbers<[1], [1], [0], [0], [0, 0, 1, 0], [], []>} : vector<1x32xbf16>, vector<8x32xbf16>, vector<1x8xf32> -> vector<1x8xf32>
    %c0_20 = arith.constant 0 : index
    %c0_21 = arith.constant 0 : index
    %25 = vector.load %arg9[%c0_20, %c0_21] : memref<1x1xf32, #tpu.memory_space<vmem>>, vector<1x1xf32>
    %26 = vector.broadcast %25 : vector<1x1xf32> to vector<1x8xf32>
    %27 = arith.addf %24, %26 : vector<1x8xf32>
    %c0_22 = arith.constant 0 : index
    %c0_23 = arith.constant 0 : index
    %28 = vector.load %arg10[%c0_22, %c0_23] : memref<1x8xf32, #tpu.memory_space<vmem>>, vector<1x8xf32>
    tpu.vector_store %arg10[%c0_22, %c0_23], %27 {strides = array<i32>} : memref<1x8xf32, #tpu.memory_space<vmem>>, vector<1x8xf32>,
    return
  }
  func.func @transform_0(%arg0: i32) -> (i32, i32) {
    %c0_i32 = arith.constant 0 : i32
    %c0_i32_0 = arith.constant 0 : i32
    return %arg0, %c0_i32 : i32, i32
  }
  func.func @transform_1(%arg0: i32) -> (i32, i32) {
    %c0_i32 = arith.constant 0 : i32
    %c0_i32_0 = arith.constant 0 : i32
    return %arg0, %c0_i32 : i32, i32
  }
  func.func @transform_2(%arg0: i32) -> (i32, i32) {
    %c0_i32 = arith.constant 0 : i32
    %c0_i32_0 = arith.constant 0 : i32
    %c0_i32_1 = arith.constant 0 : i32
    return %c0_i32, %c0_i32_0 : i32, i32
  }
  func.func @transform_3(%arg0: i32) -> (i32, i32) {
    %c0_i32 = arith.constant 0 : i32
    %c0_i32_0 = arith.constant 0 : i32
    %c0_i32_1 = arith.constant 0 : i32
    return %c0_i32, %c0_i32_0 : i32, i32
  }
  func.func @transform_4(%arg0: i32) -> (i32, i32) {
    %c0_i32 = arith.constant 0 : i32
    %c0_i32_0 = arith.constant 0 : i32
    %c0_i32_1 = arith.constant 0 : i32
    return %c0_i32, %c0_i32_0 : i32, i32
  }
  func.func @transform_5(%arg0: i32) -> (i32, i32) {
    %c0_i32 = arith.constant 0 : i32
    %c0_i32_0 = arith.constant 0 : i32
    %c0_i32_1 = arith.constant 0 : i32
    return %c0_i32, %c0_i32_0 : i32, i32
  }
  func.func @transform_6(%arg0: i32) -> (i32, i32) {
    %c0_i32 = arith.constant 0 : i32
    %c0_i32_0 = arith.constant 0 : i32
    %c0_i32_1 = arith.constant 0 : i32
    return %c0_i32, %c0_i32_0 : i32, i32
  }
  func.func @transform_7(%arg0: i32) -> (i32, i32) {
    %c0_i32 = arith.constant 0 : i32
    %c0_i32_0 = arith.constant 0 : i32
    %c0_i32_1 = arith.constant 0 : i32
    return %c0_i32, %c0_i32_0 : i32, i32
  }
  func.func @transform_8(%arg0: i32) -> (i32, i32) {
    %c0_i32 = arith.constant 0 : i32
    %c0_i32_0 = arith.constant 0 : i32
    %c0_i32_1 = arith.constant 0 : i32
    return %c0_i32, %c0_i32_0 : i32, i32
  }
  func.func @transform_9(%arg0: i32) -> (i32, i32) {
    %c0_i32 = arith.constant 0 : i32
    %c0_i32_0 = arith.constant 0 : i32
    return %c0_i32, %arg0 : i32, i32
  }
}

</mosaic_0001>

<llo_original>
// kernel: qnetwork_forward.1
$region0: #{qnetwork_forward.1}
  #allocation0 [shape = 'u32[]', space=smem, size = 0x4, offset = 0x4, fixed_abs, tag = 'smem constant byte address 0x4 - core index']
  #allocation1 [shape = 'u32[144,128]{1,0:T(1,128)}', space=vmem, size = 0x12000, scoped, tag = 'internal scratch']
  #allocation2 [shape = 'f32[1,1]{1,0:T(1,128)S(1)}', space=vmem, size = 0x200, scoped, tag = 'scoped memory for qnetwork_forward.1']
  %s0 = inlined_call_operand.vmem [shape: f32[8,8], index: 0, kind: input, shape index: {}]
  %s1 = inlined_call_operand.vmem [shape: f32[8,4], index: 1, kind: input, shape index: {}]
  %s2 = inlined_call_operand.vmem [shape: bf16[8,32], index: 2, kind: input, shape index: {}]
  %s3 = inlined_call_operand.vmem [shape: bf16[4,32], index: 3, kind: input, shape index: {}]
  %s4 = inlined_call_operand.vmem [shape: f32[1,32], index: 4, kind: input, shape index: {}]
  %s5 = inlined_call_operand.vmem [shape: bf16[32,32], index: 5, kind: input, shape index: {}]
  %s6 = inlined_call_operand.vmem [shape: f32[1,32], index: 6, kind: input, shape index: {}]
  %s7 = inlined_call_operand.vmem [shape: bf16[1,32], index: 7, kind: input, shape index: {}]
  %s8 = inlined_call_operand.<no memory space> [shape: f32[1,1], index: 8, kind: input, shape index: {}]
  %s9 = inlined_call_operand.vmem [shape: f32[1,8], index: 9, kind: output, shape index: {}]
  %s10 = sld [smem:[#allocation0]]
  $region46: #{qnetwork_forward.1} parent=0
    _
  %s12 = ssub.s32 1, %s10
  %s13 = scalar_select 0, %s12, %s10
  %v14 = vstv %s8
  %15 = vst [vmem:[#allocation2] sm:$0x1] %v14
  // Predicated region
  $region2: #{qnetwork_forward.1} parent=0 // pred_check
    _
  $region3: #{qnetwork_forward.1} parent=0 // pred_check_branch
    %17 = sbr.rel (0) target = $region5
  $region4: #{qnetwork_forward.1} parent=0 // pred_region
    _
  $region5: #{qnetwork_forward.1} parent=0 // pred_fallthru
    _
  // Predicated region
  $region6: #{qnetwork_forward.1} parent=0 // pred_check
    _
  $region7: #{qnetwork_forward.1} parent=0 // pred_check_branch
    %19 = sbr.rel (0) target = $region9
  $region8: #{qnetwork_forward.1} parent=0 // pred_region
    _
  $region9: #{qnetwork_forward.1} parent=0 // pred_fallthru
    _
  // Predicated region
  $region10: #{qnetwork_forward.1} parent=0 // pred_check
    _
  $region11: #{qnetwork_forward.1} parent=0 // pred_check_branch
    %21 = sbr.rel (0) target = $region13
  $region12: #{qnetwork_forward.1} parent=0 // pred_region
    _
  $region13: #{qnetwork_forward.1} parent=0 // pred_fallthru
    _
  // Predicated region
  $region14: #{qnetwork_forward.1} parent=0 // pred_check
    _
  $region15: #{qnetwork_forward.1} parent=0 // pred_check_branch
    %23 = sbr.rel (0) target = $region17
  $region16: #{qnetwork_forward.1} parent=0 // pred_region
    _
  $region17: #{qnetwork_forward.1} parent=0 // pred_fallthru
    _
  // Predicated region
  $region18: #{qnetwork_forward.1} parent=0 // pred_check
    _
  $region19: #{qnetwork_forward.1} parent=0 // pred_check_branch
    %25 = sbr.rel (0) target = $region21
  $region20: #{qnetwork_forward.1} parent=0 // pred_region
    _
  $region21: #{qnetwork_forward.1} parent=0 // pred_fallthru
    _
  // Predicated region
  $region22: #{qnetwork_forward.1} parent=0 // pred_check
    _
  $region23: #{qnetwork_forward.1} parent=0 // pred_check_branch
    %27 = sbr.rel (0) target = $region25
  $region24: #{qnetwork_forward.1} parent=0 // pred_region
    _
  $region25: #{qnetwork_forward.1} parent=0 // pred_fallthru
    _
  // Predicated region
  $region26: #{qnetwork_forward.1} parent=0 // pred_check
    _
  $region27: #{qnetwork_forward.1} parent=0 // pred_check_branch
    %29 = sbr.rel (0) target = $region29
  $region28: #{qnetwork_forward.1} parent=0 // pred_region
    _
  $region29: #{qnetwork_forward.1} parent=0 // pred_fallthru
    _
  // Predicated region
  $region30: #{qnetwork_forward.1} parent=0 // pred_check
    _
  $region31: #{qnetwork_forward.1} parent=0 // pred_check_branch
    %31 = sbr.rel (0) target = $region33
  $region32: #{qnetwork_forward.1} parent=0 // pred_region
    _
  $region33: #{qnetwork_forward.1} parent=0 // pred_fallthru
    _
  // Predicated region
  $region34: #{qnetwork_forward.1} parent=0 // pred_check
    _
  $region35: #{qnetwork_forward.1} parent=0 // pred_check_branch
    %33 = sbr.rel (0) target = $region37
  $region36: #{qnetwork_forward.1} parent=0 // pred_region
    _
  $region37: #{qnetwork_forward.1} parent=0 // pred_fallthru
    _
  %v35 = vld [vmem:[%s0] sm:$0xff]
  %v36 = vpack.c.bf16 %v35, %v35
  %v37 = vld [vmem:[%s1] sm:$0xff]
  %v38 = vpack.c.bf16 %v37, %v37
  %v39 = vld [vmem:[%s2] sm:$0xf]
  %v40 = vld [vmem:[%s3] sm:$0x3]
  %vm41 = vcmask 31744
  %v43 = vsel %vm41, %v38, 0
  %vm45 = vcmask 1041408
  %v47 = vsel %vm45, %v40, 0
  %49 = vmatprep.subr.bf16.mxu0 0
  %50 = vmatpush1.bf16.msra.mxu0 %v47
  %51 = vmatprep.subr.bf16.mxu0 0
  %52 = vmatpush1.bf16.msra.mxu0 0
  %53 = vmatprep.subr.bf16.mxu0 0
  %54 = vmatpush1.bf16.msra.mxu0 0
  %55 = vmatprep.subr.bf16.mxu0 0
  %56 = vmatpush1.bf16.msra.mxu0 0
  %57 = vmatprep.subr.bf16.mxu0 0
  %58 = vmatpush1.bf16.msra.mxu0 0
  %59 = vmatprep.subr.bf16.mxu0 0
  %60 = vmatpush1.bf16.msra.mxu0 0
  %61 = vmatprep.subr.bf16.mxu0 0
  %62 = vmatpush1.bf16.msra.mxu0 0
  %63 = vmatprep.subr.bf16.mxu0 0
  %64 = vmatpush1.bf16.msra.mxu0 0
  %65 = vmatprep.subr.bf16.mxu0 0
  %66 = vmatpush1.bf16.msra.mxu0 0
  %67 = vmatprep.subr.bf16.mxu0 0
  %68 = vmatpush1.bf16.msra.mxu0 0
  %69 = vmatprep.subr.bf16.mxu0 0
  %70 = vmatpush1.bf16.msra.mxu0 0
  %71 = vmatprep.subr.bf16.mxu0 0
  %72 = vmatpush1.bf16.msra.mxu0 0
  %73 = vmatprep.subr.bf16.mxu0 0
  %74 = vmatpush1.bf16.msra.mxu0 0
  %75 = vmatprep.subr.bf16.mxu0 0
  %76 = vmatpush1.bf16.msra.mxu0 0
  %77 = vmatprep.subr.bf16.mxu0 0
  %78 = vmatpush1.bf16.msra.mxu0 0
  %79 = vmatprep.subr.bf16.mxu0 0
  %80 = vmatpush1.bf16.msra.mxu0 0
  %81 = vmatprep.mubr.bf16.mxu0 0
  %82 = vmatmul.mubr.bf16.gmra.mrb[0].mxu0 %v43
  %v83 = vpop.f32.mrb[0].mxu0
  %v84 = vadd.f32 0.0, %v83
  %v85 = vpop.f32.mrb[0].mxu0
  %v86 = vpop.f32.mrb[0].mxu0
  %v87 = vpop.f32.mrb[0].mxu0
  %88 = vdwg.mxu0
  %vm89 = vcmask 64512
  %v91 = vsel %vm89, %v36, 0
  %vm93 = vcmask 1043456
  %v95 = vsel %vm93, %v39, 0
  %97 = vmatprep.subr.bf16.mxu0 0
  %98 = vmatpush1.bf16.msra.mxu0 %v95
  %99 = vmatprep.subr.bf16.mxu0 0
  %100 = vmatpush1.bf16.msra.mxu0 0
  %101 = vmatprep.subr.bf16.mxu0 0
  %102 = vmatpush1.bf16.msra.mxu0 0
  %103 = vmatprep.subr.bf16.mxu0 0
  %104 = vmatpush1.bf16.msra.mxu0 0
  %105 = vmatprep.subr.bf16.mxu0 0
  %106 = vmatpush1.bf16.msra.mxu0 0
  %107 = vmatprep.subr.bf16.mxu0 0
  %108 = vmatpush1.bf16.msra.mxu0 0
  %109 = vmatprep.subr.bf16.mxu0 0
  %110 = vmatpush1.bf16.msra.mxu0 0
  %111 = vmatprep.subr.bf16.mxu0 0
  %112 = vmatpush1.bf16.msra.mxu0 0
  %113 = vmatprep.subr.bf16.mxu0 0
  %114 = vmatpush1.bf16.msra.mxu0 0
  %115 = vmatprep.subr.bf16.mxu0 0
  %116 = vmatpush1.bf16.msra.mxu0 0
  %117 = vmatprep.subr.bf16.mxu0 0
  %118 = vmatpush1.bf16.msra.mxu0 0
  %119 = vmatprep.subr.bf16.mxu0 0
  %120 = vmatpush1.bf16.msra.mxu0 0
  %121 = vmatprep.subr.bf16.mxu0 0
  %122 = vmatpush1.bf16.msra.mxu0 0
  %123 = vmatprep.subr.bf16.mxu0 0
  %124 = vmatpush1.bf16.msra.mxu0 0
  %125 = vmatprep.subr.bf16.mxu0 0
  %126 = vmatpush1.bf16.msra.mxu0 0
  %127 = vmatprep.subr.bf16.mxu0 0
  %128 = vmatpush1.bf16.msra.mxu0 0
  %129 = vmatprep.mubr.bf16.mxu0 0
  %130 = vmatmul.mubr.bf16.gmra.mrb[0].mxu0 %v91
  %v131 = vpop.f32.mrb[0].mxu0
  %v132 = vadd.f32 %v84, %v131
  %v133 = vpop.f32.mrb[0].mxu0
  %v134 = vpop.f32.mrb[0].mxu0
  %v135 = vpop.f32.mrb[0].mxu0
  %136 = vdwg.mxu0
  %v137 = vld [vmem:[%s4] sm:$0x1]
  %v139 = vlaneseq
  %v140 = vshrl.u32 %v139, 7
  %v141 = vsub.s32 0, %v140
  %v142 = vrot.slane %v137, %v141
  %v144 = vadd.f32 %v132, %v142
  %v145 = vmax.f32 %v144, 0.0
  %v146 = vpack.c.bf16 %v145, %v145
  %v147 = vld [vmem:[%s5] sm:$0xf]
  %v148 = vld [vmem:[%s5 + $0x4] sm:$0xf]
  %v149 = vld [vmem:[%s5 + $0x8] sm:$0xf]
  %v150 = vld [vmem:[%s5 + $0xc] sm:$0xf]
  %v151 = vld [vmem:[%s6] sm:$0x1]
  %v153 = vlaneseq
  %v154 = vshrl.u32 %v153, 7
  %v155 = vsub.s32 0, %v154
  %v156 = vrot.slane %v151, %v155
  %v162 = vunpack.c.l.b16 %v147
  %v163 = vunpack.c.l.b16 %v148
  %v164 = vunpack.c.l.b16 %v149
  %v165 = vunpack.c.l.b16 %v150
  %v166 = vpack.c.b16 %v163, %v162
  %v167 = vpack.c.b16 %v165, %v164
  %vm170 = vcmask 261120
  %v172 = vsel %vm170, %v146, 0
  %174 = vmatprep.subr.bf16.mxu0 0
  %175 = vmatpush1.bf16.msra.mxu0 %v166
  %176 = vmatprep.subr.bf16.mxu0 0
  %177 = vmatpush1.bf16.msra.mxu0 %v167
  %178 = vmatprep.subr.bf16.mxu0 0
  %179 = vmatpush1.bf16.msra.mxu0 0
  %180 = vmatprep.subr.bf16.mxu0 0
  %181 = vmatpush1.bf16.msra.mxu0 0
  %182 = vmatprep.subr.bf16.mxu0 0
  %183 = vmatpush1.bf16.msra.mxu0 0
  %184 = vmatprep.subr.bf16.mxu0 0
  %185 = vmatpush1.bf16.msra.mxu0 0
  %186 = vmatprep.subr.bf16.mxu0 0
  %187 = vmatpush1.bf16.msra.mxu0 0
  %188 = vmatprep.subr.bf16.mxu0 0
  %189 = vmatpush1.bf16.msra.mxu0 0
  %190 = vmatprep.subr.bf16.mxu0 0
  %191 = vmatpush1.bf16.msra.mxu0 0
  %192 = vmatprep.subr.bf16.mxu0 0
  %193 = vmatpush1.bf16.msra.mxu0 0
  %194 = vmatprep.subr.bf16.mxu0 0
  %195 = vmatpush1.bf16.msra.mxu0 0
  %196 = vmatprep.subr.bf16.mxu0 0
  %197 = vmatpush1.bf16.msra.mxu0 0
  %198 = vmatprep.subr.bf16.mxu0 0
  %199 = vmatpush1.bf16.msra.mxu0 0
  %200 = vmatprep.subr.bf16.mxu0 0
  %201 = vmatpush1.bf16.msra.mxu0 0
  %202 = vmatprep.subr.bf16.mxu0 0
  %203 = vmatpush1.bf16.msra.mxu0 0
  %204 = vmatprep.subr.bf16.mxu0 0
  %205 = vmatpush1.bf16.msra.mxu0 0
  %206 = vmatprep.mubr.bf16.mxu0 0
  %207 = vmatmul.mubr.bf16.gmra.mrb[0].mxu0 %v172
  %v208 = vpop.f32.mrb[0].mxu0
  %v209 = vadd.f32 %v156, %v208
  %v210 = vpop.f32.mrb[0].mxu0
  %v211 = vpop.f32.mrb[0].mxu0
  %v212 = vpop.f32.mrb[0].mxu0
  %213 = vdwg.mxu0
  %v214 = vmax.f32 %v209, 0.0
  %v215 = vld [vmem:[%s7] sm:$0x1]
  %v216 = vpack.c.bf16 %v214, %v214
  %v217 = vld [vmem:[#allocation2] sm:$0x1]
  %219 = vset.pattern.permute.xlu0 0
  %220 = vperm.xlu0 %219, %v217
  %v221 = vpop.permute.xlu0 %220
  %v223 = vlaneseq
  %v224 = vshrl.u32 %v223, 7
  %v225 = vsub.s32 0, %v224
  %v226 = vrot.slane %v221, %v225
  %v228 = vsel %vm170, %v215, 0
  %v231 = vsel %vm170, %v216, 0
  %233 = vmatprep.subr.bf16.mxu0 0
  %234 = vmatpush1.bf16.xpose.msra.mxu0 %v231
  %235 = vmatprep.subr.bf16.mxu0 0
  %236 = vmatpush1.bf16.xpose.msra.mxu0 0
  %237 = vmatprep.subr.bf16.mxu0 0
  %238 = vmatpush1.bf16.xpose.msra.mxu0 0
  %239 = vmatprep.subr.bf16.mxu0 0
  %240 = vmatpush1.bf16.xpose.msra.mxu0 0
  %241 = vmatprep.subr.bf16.mxu0 0
  %242 = vmatpush1.bf16.xpose.msra.mxu0 0
  %243 = vmatprep.subr.bf16.mxu0 0
  %244 = vmatpush1.bf16.xpose.msra.mxu0 0
  %245 = vmatprep.subr.bf16.mxu0 0
  %246 = vmatpush1.bf16.xpose.msra.mxu0 0
  %247 = vmatprep.subr.bf16.mxu0 0
  %248 = vmatpush1.bf16.xpose.msra.mxu0 0
  %249 = vmatprep.subr.bf16.mxu0 0
  %250 = vmatpush1.bf16.xpose.msra.mxu0 0
  %251 = vmatprep.subr.bf16.mxu0 0
  %252 = vmatpush1.bf16.xpose.msra.mxu0 0
  %253 = vmatprep.subr.bf16.mxu0 0
  %254 = vmatpush1.bf16.xpose.msra.mxu0 0
  %255 = vmatprep.subr.bf16.mxu0 0
  %256 = vmatpush1.bf16.xpose.msra.mxu0 0
  %257 = vmatprep.subr.bf16.mxu0 0
  %258 = vmatpush1.bf16.xpose.msra.mxu0 0
  %259 = vmatprep.subr.bf16.mxu0 0
  %260 = vmatpush1.bf16.xpose.msra.mxu0 0
  %261 = vmatprep.subr.bf16.mxu0 0
  %262 = vmatpush1.bf16.xpose.msra.mxu0 0
  %263 = vmatprep.subr.bf16.mxu0 0
  %264 = vmatpush1.bf16.xpose.msra.mxu0 0
  %265 = vmatprep.mubr.bf16.mxu0 0
  %266 = vmatmul.mubr.bf16.gmra.mrb[0].mxu0 %v228
  %v267 = vpop.f32.mrb[0].mxu0
  %v268 = vadd.f32 %v226, %v267
  %v269 = vpop.f32.mrb[0].mxu0
  %v270 = vpop.f32.mrb[0].mxu0
  %v271 = vpop.f32.mrb[0].mxu0
  %272 = vdwg.mxu0
  %vm273 = vcmask 57344
  %274 = vst.msk [vmem:[%s9] sm:$0x1] %vm273, %v268
  // Predicated region
  $region38: #{qnetwork_forward.1} parent=0 // pred_check
    _
  $region39: #{qnetwork_forward.1} parent=0 // pred_check_branch
    %276 = sbr.rel (0) target = $region41
  $region40: #{qnetwork_forward.1} parent=0 // pred_region
    _
  $region41: #{qnetwork_forward.1} parent=0 // pred_fallthru
    _
  // Predicated region
  $region42: #{qnetwork_forward.1} parent=0 // pred_check
    _
  $region43: #{qnetwork_forward.1} parent=0 // pred_check_branch
    %278 = sbr.rel (0) target = $region45
  $region44: #{qnetwork_forward.1} parent=0 // pred_region
    _
  $region45: #{qnetwork_forward.1} parent=0 // pred_fallthru
    _

</llo_original>
